<compile_context>
chip_gen: v6e
topology: v6e:2x2x1
jax: 0.10.0
libtpu: 0.0.40
codegen_flags: <defaults>
</compile_context>

<pallas_src>
import functools
import math

import jax
import jax.numpy as jnp
from jax import lax
from jax.experimental import pallas as pl
from jax.experimental.pallas import tpu as pltpu


# ---------------------------------------------------------------------------
# Kernel: one grid step = `Nb` images; K*K accumulating MXU matmuls per image.
#   x_ref    : (Nb, Cin, HW_p)    NCHW spatial flattened + zero padded (lane-dense)
#   w_ref    : (K*K, Cout, Cin)   per-tap effective weight (LoRA delta + scaling folded)
#   bias_ref : (Cout, 1)          f32
#   o_ref    : (Nb, Cout, L_out)  L_out = round_up(Ho*W, 128); wrapper keeps valid cols
# ---------------------------------------------------------------------------
def conv_lora_kernel(x_ref, w_ref, bias_ref, o_ref, *, Nb, K, W, L_out):
    bias = bias_ref[...].astype(jnp.float32)          # (Cout, 1), broadcasts below
    for b in range(Nb):
        acc = bias                                    # bias folded into first add
        for kh in range(K):
            for kw in range(K):
                tap = kh * K + kw
                off = kh * W + kw                     # static; off + L_out <= HW_p
                x_slice = x_ref[b, :, off:off + L_out].astype(w_ref.dtype)
                acc = acc + jnp.dot(w_ref[tap], x_slice,
                                    preferred_element_type=jnp.float32)
        o_ref[b] = acc.astype(o_ref.dtype)            # full-width, unmasked store


# ---------------------------------------------------------------------------
# Wrapper: tiny, hoisted parameter prep + one pallas_call over the batch.
# ---------------------------------------------------------------------------
def conv_lora_forward(x_nchw, conv_w, conv_b, lora_A, lora_B, scaling,
                      *, images_per_step=1, mxu_dtype=jnp.float32):
    N, Cin, H, W = x_nchw.shape
    Cout, Cin_w, KH, KW = conv_w.shape
    assert Cin == Cin_w and KH == KW, "square kernel / groups=1 expected"
    K = KH
    Ho, Wo = H - K + 1, W - K + 1
    OW = Ho * W                                   # "wide" output row (cols >= Wo are junk)
    L_out = ((OW + 127) // 128) * 128             # lane-dense output width (multiple of 128)
    off_max = (K - 1) * W + (K - 1)
    HW_p = off_max + L_out                        # padded flattened-spatial length
    Nb = images_per_step
    assert N % Nb == 0, "images_per_step must divide the batch"

    # --- hoisted parameter-side prep (review items 3 & 10, tiny) ------------
    # Exactly PyTorch's  conv.weight + (lora_B @ lora_A).view(weight.shape) * scaling
    delta = (lora_B @ lora_A).reshape(Cout, Cin, K, K)
    w_eff = conv_w + scaling * delta
    # Per-tap stacked layout (K*K, Cout, Cin): w_taps[kh*K+kw] is a clean MXU
    # LHS tile, so the kernel never slices weight lanes.
    w_taps = w_eff.transpose(2, 3, 0, 1).reshape(K * K, Cout, Cin).astype(mxu_dtype)
    bias2d = conv_b.reshape(Cout, 1).astype(jnp.float32)

    # Free row-major flatten of NCHW; zero-pad the flattened spatial axis so
    # every shifted slice [off, off+L_out) is in bounds and every output column
    # is well-defined.
    x_flat = x_nchw.reshape(N, Cin, H * W)
    x_pad = jnp.pad(x_flat, ((0, 0), (0, 0), (0, HW_p - H * W)))

    out_wide = pl.pallas_call(
        functools.partial(conv_lora_kernel, Nb=Nb, K=K, W=W, L_out=L_out),
        out_shape=jax.ShapeDtypeStruct((N, Cout, L_out), x_nchw.dtype),
        grid=(N // Nb,),
        in_specs=[
            pl.BlockSpec((Nb, Cin, HW_p), lambda n: (n, 0, 0)),
            pl.BlockSpec((K * K, Cout, Cin), lambda n: (0, 0, 0)),
            pl.BlockSpec((Cout, 1), lambda n: (0, 0)),
        ],
        out_specs=pl.BlockSpec((Nb, Cout, L_out), lambda n: (n, 0, 0)),
        compiler_params=pltpu.CompilerParams(
            dimension_semantics=("parallel",)),   # batch steps shard across TCs on v7x
    )(x_pad, w_taps, bias2d)

    # Already NCHW-ordered: keep valid columns (free reshape), drop junk width.
    return out_wide[:, :, :OW].reshape(N, Cout, Ho, W)[:, :, :, :Wo]


# ---------------------------------------------------------------------------
# Pure-JAX reference for verification
# ---------------------------------------------------------------------------
def conv_lora_ref(x_nchw, conv_w, conv_b, lora_A, lora_B, scaling):
    w_eff = conv_w + (lora_B @ lora_A).reshape(conv_w.shape) * scaling
    out = lax.conv_general_dilated(
        x_nchw, w_eff, window_strides=(1, 1), padding="VALID",
        dimension_numbers=("NCHW", "OIHW", "NCHW"),
    )
    return out + conv_b[None, :, None, None]


if __name__ == "__main__":
    # ConvLoRA(nn.Conv2d, in_channels=4, out_channels=8, kernel_size=3, r=2, lora_alpha=1)
    N, Cin, H, W = 2, 4, 16, 16
    Cout, K, r, lora_alpha = 8, 3, 2, 1
    scaling = lora_alpha / r

    key = jax.random.PRNGKey(0)
    kx, kw, kb, ka, kB = jax.random.split(key, 5)

    x = jax.random.normal(kx, (N, Cin, H, W), dtype=jnp.float32)

    # Conv2d reset_parameters: kaiming-uniform-ish bound 1/sqrt(fan_in)
    fan_in = Cin * K * K
    bound = 1.0 / math.sqrt(fan_in)
    conv_w = jax.random.uniform(kw, (Cout, Cin, K, K), jnp.float32, -bound, bound)
    conv_b = jax.random.uniform(kb, (Cout,), jnp.float32, -bound, bound)

    # LoRA params.  reset_parameters() zero-inits lora_B (making the branch a
    # no-op); use small random values so the fused path is actually exercised.
    # TODO(synk): lora_dropout with p > 0 is not implemented (default p=0 is identity).
    a_bound = 1.0 / math.sqrt(Cin * K)
    lora_A = jax.random.uniform(ka, (r * K, Cin * K), jnp.float32, -a_bound, a_bound)
    lora_B = jax.random.uniform(kB, (Cout * K, r * K), jnp.float32, -0.1, 0.1)

    ref = conv_lora_ref(x, conv_w, conv_b, lora_A, lora_B, scaling)

    # f32 MXU operands: tight match with the f32 XLA reference.
    out = conv_lora_forward(x, conv_w, conv_b, lora_A, lora_B, scaling,
                            images_per_step=1, mxu_dtype=jnp.float32)
    out = jax.block_until_ready(out)
    assert out.shape == (N, Cout, H - K + 1, W - K + 1)
    assert jnp.allclose(out, ref, atol=1e-4, rtol=1e-4), "f32 path mismatch vs reference"

    # bf16 MXU operands with f32 accumulation (the production setting per the
    # perf review); also exercises images_per_step > 1 batch blocking.
    out_bf16 = conv_lora_forward(x, conv_w, conv_b, lora_A, lora_B, scaling,
                                 images_per_step=2, mxu_dtype=jnp.bfloat16)
    out_bf16 = jax.block_until_ready(out_bf16)
    assert out_bf16.shape == out.shape
    assert jnp.allclose(out_bf16, ref, atol=5e-2, rtol=5e-2), "bf16 path mismatch vs reference"

    print("KERNEL_OK")
</pallas_src>

<mosaic_0001>
module attributes {stable_mosaic.version = 11 : i64} {
  func.func @conv_lora_kernel(%arg0: i32, %arg1: memref<1x4x290xf32, #tpu.memory_space<vmem>>, %arg2: memref<9x8x4xf32, #tpu.memory_space<vmem>>, %arg3: memref<8x1xf32, #tpu.memory_space<vmem>>, %arg4: memref<1x8x256xf32, #tpu.memory_space<vmem>>) attributes {dimension_semantics = [#tpu.dimension_semantics<parallel>], iteration_bounds = array<i64: 2>, scalar_prefetch = 0 : i64, scratch_operands = 0 : i64, tpu.core_type = #tpu.core_type<tc>, window_params = [{transform_indices = @transform_0, window_bounds = array<i64: 1, 4, 290>}, {pipeline_mode = #tpu.pipeline_mode<synchronous>, transform_indices = @transform_1, window_bounds = array<i64: 9, 8, 4>}, {pipeline_mode = #tpu.pipeline_mode<synchronous>, transform_indices = @transform_2, window_bounds = array<i64: 8, 1>}, {transform_indices = @transform_3, window_bounds = array<i64: 1, 8, 256>}]} {
    %c0 = arith.constant 0 : index
    %c0_0 = arith.constant 0 : index
    %0 = vector.load %arg3[%c0, %c0_0] : memref<8x1xf32, #tpu.memory_space<vmem>>, vector<8x1xf32>
    %c0_1 = arith.constant 0 : index
    %c0_2 = arith.constant 0 : index
    %c0_3 = arith.constant 0 : index
    %1 = vector.load %arg1[%c0_1, %c0_2, %c0_3] : memref<1x4x290xf32, #tpu.memory_space<vmem>>, vector<1x4x256xf32>
    %2 = vector.shape_cast %1 : vector<1x4x256xf32> to vector<4x256xf32>
    %c0_4 = arith.constant 0 : index
    %c0_5 = arith.constant 0 : index
    %c0_6 = arith.constant 0 : index
    %3 = vector.load %arg2[%c0_4, %c0_5, %c0_6] : memref<9x8x4xf32, #tpu.memory_space<vmem>>, vector<1x8x4xf32>
    %4 = vector.shape_cast %3 : vector<1x8x4xf32> to vector<8x4xf32>
    %cst = arith.constant dense<0.000000e+00> : vector<8x256xf32>
    %5 = tpu.matmul %4, %2, %cst {dimension_numbers = #tpu.dot_dimension_numbers<[1], [0], [0], [1], [0, 0, 1, 1], [], []>} : vector<8x4xf32>, vector<4x256xf32>, vector<8x256xf32> -> vector<8x256xf32>
    %6 = vector.broadcast %0 : vector<8x1xf32> to vector<8x256xf32>
    %7 = arith.addf %6, %5 : vector<8x256xf32>
    %c0_7 = arith.constant 0 : index
    %c0_8 = arith.constant 0 : index
    %c1 = arith.constant 1 : index
    %8 = vector.load %arg1[%c0_7, %c0_8, %c1] : memref<1x4x290xf32, #tpu.memory_space<vmem>>, vector<1x4x256xf32>
    %9 = vector.shape_cast %8 : vector<1x4x256xf32> to vector<4x256xf32>
    %c1_9 = arith.constant 1 : index
    %c0_10 = arith.constant 0 : index
    %c0_11 = arith.constant 0 : index
    %10 = vector.load %arg2[%c1_9, %c0_10, %c0_11] : memref<9x8x4xf32, #tpu.memory_space<vmem>>, vector<1x8x4xf32>
    %11 = vector.shape_cast %10 : vector<1x8x4xf32> to vector<8x4xf32>
    %cst_12 = arith.constant dense<0.000000e+00> : vector<8x256xf32>
    %12 = tpu.matmul %11, %9, %cst_12 {dimension_numbers = #tpu.dot_dimension_numbers<[1], [0], [0], [1], [0, 0, 1, 1], [], []>} : vector<8x4xf32>, vector<4x256xf32>, vector<8x256xf32> -> vector<8x256xf32>
    %13 = arith.addf %7, %12 : vector<8x256xf32>
    %c0_13 = arith.constant 0 : index
    %c0_14 = arith.constant 0 : index
    %c2 = arith.constant 2 : index
    %14 = vector.load %arg1[%c0_13, %c0_14, %c2] : memref<1x4x290xf32, #tpu.memory_space<vmem>>, vector<1x4x256xf32>
    %15 = vector.shape_cast %14 : vector<1x4x256xf32> to vector<4x256xf32>
    %c2_15 = arith.constant 2 : index
    %c0_16 = arith.constant 0 : index
    %c0_17 = arith.constant 0 : index
    %16 = vector.load %arg2[%c2_15, %c0_16, %c0_17] : memref<9x8x4xf32, #tpu.memory_space<vmem>>, vector<1x8x4xf32>
    %17 = vector.shape_cast %16 : vector<1x8x4xf32> to vector<8x4xf32>
    %cst_18 = arith.constant dense<0.000000e+00> : vector<8x256xf32>
    %18 = tpu.matmul %17, %15, %cst_18 {dimension_numbers = #tpu.dot_dimension_numbers<[1], [0], [0], [1], [0, 0, 1, 1], [], []>} : vector<8x4xf32>, vector<4x256xf32>, vector<8x256xf32> -> vector<8x256xf32>
    %19 = arith.addf %13, %18 : vector<8x256xf32>
    %c0_19 = arith.constant 0 : index
    %c0_20 = arith.constant 0 : index
    %c16 = arith.constant 16 : index
    %20 = vector.load %arg1[%c0_19, %c0_20, %c16] : memref<1x4x290xf32, #tpu.memory_space<vmem>>, vector<1x4x256xf32>
    %21 = vector.shape_cast %20 : vector<1x4x256xf32> to vector<4x256xf32>
    %c3 = arith.constant 3 : index
    %c0_21 = arith.constant 0 : index
    %c0_22 = arith.constant 0 : index
    %22 = vector.load %arg2[%c3, %c0_21, %c0_22] : memref<9x8x4xf32, #tpu.memory_space<vmem>>, vector<1x8x4xf32>
    %23 = vector.shape_cast %22 : vector<1x8x4xf32> to vector<8x4xf32>
    %cst_23 = arith.constant dense<0.000000e+00> : vector<8x256xf32>
    %24 = tpu.matmul %23, %21, %cst_23 {dimension_numbers = #tpu.dot_dimension_numbers<[1], [0], [0], [1], [0, 0, 1, 1], [], []>} : vector<8x4xf32>, vector<4x256xf32>, vector<8x256xf32> -> vector<8x256xf32>
    %25 = arith.addf %19, %24 : vector<8x256xf32>
    %c0_24 = arith.constant 0 : index
    %c0_25 = arith.constant 0 : index
    %c17 = arith.constant 17 : index
    %26 = vector.load %arg1[%c0_24, %c0_25, %c17] : memref<1x4x290xf32, #tpu.memory_space<vmem>>, vector<1x4x256xf32>
    %27 = vector.shape_cast %26 : vector<1x4x256xf32> to vector<4x256xf32>
    %c4 = arith.constant 4 : index
    %c0_26 = arith.constant 0 : index
    %c0_27 = arith.constant 0 : index
    %28 = vector.load %arg2[%c4, %c0_26, %c0_27] : memref<9x8x4xf32, #tpu.memory_space<vmem>>, vector<1x8x4xf32>
    %29 = vector.shape_cast %28 : vector<1x8x4xf32> to vector<8x4xf32>
    %cst_28 = arith.constant dense<0.000000e+00> : vector<8x256xf32>
    %30 = tpu.matmul %29, %27, %cst_28 {dimension_numbers = #tpu.dot_dimension_numbers<[1], [0], [0], [1], [0, 0, 1, 1], [], []>} : vector<8x4xf32>, vector<4x256xf32>, vector<8x256xf32> -> vector<8x256xf32>
    %31 = arith.addf %25, %30 : vector<8x256xf32>
    %c0_29 = arith.constant 0 : index
    %c0_30 = arith.constant 0 : index
    %c18 = arith.constant 18 : index
    %32 = vector.load %arg1[%c0_29, %c0_30, %c18] : memref<1x4x290xf32, #tpu.memory_space<vmem>>, vector<1x4x256xf32>
    %33 = vector.shape_cast %32 : vector<1x4x256xf32> to vector<4x256xf32>
    %c5 = arith.constant 5 : index
    %c0_31 = arith.constant 0 : index
    %c0_32 = arith.constant 0 : index
    %34 = vector.load %arg2[%c5, %c0_31, %c0_32] : memref<9x8x4xf32, #tpu.memory_space<vmem>>, vector<1x8x4xf32>
    %35 = vector.shape_cast %34 : vector<1x8x4xf32> to vector<8x4xf32>
    %cst_33 = arith.constant dense<0.000000e+00> : vector<8x256xf32>
    %36 = tpu.matmul %35, %33, %cst_33 {dimension_numbers = #tpu.dot_dimension_numbers<[1], [0], [0], [1], [0, 0, 1, 1], [], []>} : vector<8x4xf32>, vector<4x256xf32>, vector<8x256xf32> -> vector<8x256xf32>
    %37 = arith.addf %31, %36 : vector<8x256xf32>
    %c0_34 = arith.constant 0 : index
    %c0_35 = arith.constant 0 : index
    %c32 = arith.constant 32 : index
    %38 = vector.load %arg1[%c0_34, %c0_35, %c32] : memref<1x4x290xf32, #tpu.memory_space<vmem>>, vector<1x4x256xf32>
    %39 = vector.shape_cast %38 : vector<1x4x256xf32> to vector<4x256xf32>
    %c6 = arith.constant 6 : index
    %c0_36 = arith.constant 0 : index
    %c0_37 = arith.constant 0 : index
    %40 = vector.load %arg2[%c6, %c0_36, %c0_37] : memref<9x8x4xf32, #tpu.memory_space<vmem>>, vector<1x8x4xf32>
    %41 = vector.shape_cast %40 : vector<1x8x4xf32> to vector<8x4xf32>
    %cst_38 = arith.constant dense<0.000000e+00> : vector<8x256xf32>
    %42 = tpu.matmul %41, %39, %cst_38 {dimension_numbers = #tpu.dot_dimension_numbers<[1], [0], [0], [1], [0, 0, 1, 1], [], []>} : vector<8x4xf32>, vector<4x256xf32>, vector<8x256xf32> -> vector<8x256xf32>
    %43 = arith.addf %37, %42 : vector<8x256xf32>
    %c0_39 = arith.constant 0 : index
    %c0_40 = arith.constant 0 : index
    %c33 = arith.constant 33 : index
    %44 = vector.load %arg1[%c0_39, %c0_40, %c33] : memref<1x4x290xf32, #tpu.memory_space<vmem>>, vector<1x4x256xf32>
    %45 = vector.shape_cast %44 : vector<1x4x256xf32> to vector<4x256xf32>
    %c7 = arith.constant 7 : index
    %c0_41 = arith.constant 0 : index
    %c0_42 = arith.constant 0 : index
    %46 = vector.load %arg2[%c7, %c0_41, %c0_42] : memref<9x8x4xf32, #tpu.memory_space<vmem>>, vector<1x8x4xf32>
    %47 = vector.shape_cast %46 : vector<1x8x4xf32> to vector<8x4xf32>
    %cst_43 = arith.constant dense<0.000000e+00> : vector<8x256xf32>
    %48 = tpu.matmul %47, %45, %cst_43 {dimension_numbers = #tpu.dot_dimension_numbers<[1], [0], [0], [1], [0, 0, 1, 1], [], []>} : vector<8x4xf32>, vector<4x256xf32>, vector<8x256xf32> -> vector<8x256xf32>
    %49 = arith.addf %43, %48 : vector<8x256xf32>
    %c0_44 = arith.constant 0 : index
    %c0_45 = arith.constant 0 : index
    %c34 = arith.constant 34 : index
    %50 = vector.load %arg1[%c0_44, %c0_45, %c34] : memref<1x4x290xf32, #tpu.memory_space<vmem>>, vector<1x4x256xf32>
    %51 = vector.shape_cast %50 : vector<1x4x256xf32> to vector<4x256xf32>
    %c8 = arith.constant 8 : index
    %c0_46 = arith.constant 0 : index
    %c0_47 = arith.constant 0 : index
    %52 = vector.load %arg2[%c8, %c0_46, %c0_47] : memref<9x8x4xf32, #tpu.memory_space<vmem>>, vector<1x8x4xf32>
    %53 = vector.shape_cast %52 : vector<1x8x4xf32> to vector<8x4xf32>
    %cst_48 = arith.constant dense<0.000000e+00> : vector<8x256xf32>
    %54 = tpu.matmul %53, %51, %cst_48 {dimension_numbers = #tpu.dot_dimension_numbers<[1], [0], [0], [1], [0, 0, 1, 1], [], []>} : vector<8x4xf32>, vector<4x256xf32>, vector<8x256xf32> -> vector<8x256xf32>
    %55 = arith.addf %49, %54 : vector<8x256xf32>
    %c0_49 = arith.constant 0 : index
    %c0_50 = arith.constant 0 : index
    %c0_51 = arith.constant 0 : index
    %56 = vector.load %arg4[%c0_49, %c0_50, %c0_51] : memref<1x8x256xf32, #tpu.memory_space<vmem>>, vector<1x8x256xf32>
    %57 = vector.shape_cast %56 : vector<1x8x256xf32> to vector<8x256xf32>
    %58 = vector.shape_cast %55 : vector<8x256xf32> to vector<1x8x256xf32>
    tpu.vector_store %arg4[%c0_49, %c0_50, %c0_51], %58 {strides = array<i32>} : memref<1x8x256xf32, #tpu.memory_space<vmem>>, vector<1x8x256xf32>,
    return
  }
  func.func @transform_0(%arg0: i32) -> (i32, i32, i32) {
    %c0_i32 = arith.constant 0 : i32
    %c0_i32_0 = arith.constant 0 : i32
    %c0_i32_1 = arith.constant 0 : i32
    return %arg0, %c0_i32, %c0_i32_0 : i32, i32, i32
  }
  func.func @transform_1(%arg0: i32) -> (i32, i32, i32) {
    %c0_i32 = arith.constant 0 : i32
    %c0_i32_0 = arith.constant 0 : i32
    %c0_i32_1 = arith.constant 0 : i32
    %c0_i32_2 = arith.constant 0 : i32
    return %c0_i32, %c0_i32_0, %c0_i32_1 : i32, i32, i32
  }
  func.func @transform_2(%arg0: i32) -> (i32, i32) {
    %c0_i32 = arith.constant 0 : i32
    %c0_i32_0 = arith.constant 0 : i32
    %c0_i32_1 = arith.constant 0 : i32
    return %c0_i32, %c0_i32_0 : i32, i32
  }
  func.func @transform_3(%arg0: i32) -> (i32, i32, i32) {
    %c0_i32 = arith.constant 0 : i32
    %c0_i32_0 = arith.constant 0 : i32
    %c0_i32_1 = arith.constant 0 : i32
    return %arg0, %c0_i32, %c0_i32_0 : i32, i32, i32
  }
}

</mosaic_0001>

<llo_original>
// kernel: tpu_custom_call.1
$region0: #{tpu_custom_call.1}
  #allocation0 [shape = 'u32[]', space=smem, size = 0x4, offset = 0x4, fixed_abs, tag = 'smem constant byte address 0x4 - core index']
  #allocation1 [shape = 'u32[144,128]{1,0:T(1,128)}', space=vmem, size = 0x12000, scoped, tag = 'internal scratch']
  %s0 = inlined_call_operand.vmem [shape: f32[2,4,290], index: 0, kind: input, shape index: {}]
  %s1 = inlined_call_operand.vmem [shape: f32[9,8,4], index: 1, kind: input, shape index: {}]
  %s2 = inlined_call_operand.vmem [shape: f32[8,1], index: 2, kind: input, shape index: {}]
  %s3 = inlined_call_operand.hbm [shape: f32[2,8,256], index: 3, kind: output, shape index: {}]
  %s4 = sld [smem:[#allocation0]]
  $region45: #{tpu_custom_call.1} parent=0
    _
  %s6 = ssub.s32 1, %s4
  %s7 = scalar_select 0, %s6, %s4
  $region1: #{tpu_custom_call.1} parent=0
    #allocation2 [shape = 'u8[16384]{0}', space=vmem, size = 0x4000, scoped, tag = 'output window, operand 0']
    #allocation3 [shape = 's32[2]{0}', space=sflag, size = 0x8, scoped, tag = 'scoped memory for tpu_custom_call.1']
    %8 = vsyncpa [#allocation3], 0
    %s9 = scalar_lea.sflag [#allocation3], 1
    %10 = vsyncpa %s9, 0
    loop: start=0, step=1, limit=4
    $region2: #{tpu_custom_call.1} parent=1 // loop_pre_header
      _
    $region3: #{tpu_custom_call.1} parent=1 // loop_header
      %s12 = sphi 0, %s16
      %p13 = scmp.ge.s32.totalorder %s12, 4
      %s22 = sphi 0, %s24
      %s25 = sphi 0, %s22
      %s26 = sphi 0, %s25
      %s42 = sphi 0, %s26
      %s46 = sphi 0, %s46
      %s48 = sphi 0, %s46
      %s49 = sphi 0, %s48
      %s63 = sphi 0, %s49
      %s67 = sphi 0, %s67
      %s69 = sphi 0, %s67
      %s70 = sphi 0, %s69
      %s84 = sphi 0, %s70
      %s90 = sphi 0, %s92
      %s93 = sphi 0, %s90
      %s94 = sphi 0, %s93
      %s110 = sphi 0, %s94
    $region4: #{tpu_custom_call.1} parent=1 // loop_header_branch
      %15 = sbr.rel (%p13) target = $region8
    $region5: #{tpu_custom_call.1} parent=1 // loop_body
      %s17 = ssub.s32 %s12, 1
      %s18 = ssub.s32 %s12, 2
      %s19 = sadd.s32 %s12, 1
      %s20 = ssub.s32 %s12, %s19
      %p21 = scmp.eq.s32.totalorder %s20, 0
      %s23 = sadd.s32 %s22, 1
      %s24 = scalar_select %p21, %s22, %s23
      %p27 = pneg %p21
      %p28 = scmp.eq.s32.totalorder %s12, 1
      %p29 = por %p27, %p28
      %p30 = scmp.ne.s32.totalorder %s22, %s25
      %p31 = scmp.eq.s32.totalorder %s12, 0
      %p32 = por %p30, %p31
      %p33 = scmp.ne.s32.totalorder %s22, %s25
      %p34 = scmp.eq.s32.totalorder %s17, 1
      %p35 = por %p33, %p34
      %p36 = scmp.ne.s32.totalorder %s25, %s26
      %p37 = scmp.eq.s32.totalorder %s17, 0
      %p38 = por %p36, %p37
      %p39 = scmp.ne.s32.totalorder %s25, %s26
      %p40 = scmp.eq.s32.totalorder %s18, 1
      %p41 = por %p39, %p40
      %p43 = scmp.ne.s32.totalorder %s26, %s42
      %p44 = scmp.eq.s32.totalorder %s18, 0
      %p45 = por %p43, %p44
      %s47 = sadd.s32 %s46, 1
      %p50 = scmp.eq.s32.totalorder %s12, 1
      %p51 = scmp.ne.s32.totalorder %s46, %s48
      %p52 = scmp.eq.s32.totalorder %s12, 0
      %p53 = por %p51, %p52
      %p54 = scmp.ne.s32.totalorder %s46, %s48
      %p55 = scmp.eq.s32.totalorder %s17, 1
      %p56 = por %p54, %p55
      %p57 = scmp.ne.s32.totalorder %s48, %s49
      %p58 = scmp.eq.s32.totalorder %s17, 0
      %p59 = por %p57, %p58
      %p60 = scmp.ne.s32.totalorder %s48, %s49
      %p61 = scmp.eq.s32.totalorder %s18, 1
      %p62 = por %p60, %p61
      %p64 = scmp.ne.s32.totalorder %s49, %s63
      %p65 = scmp.eq.s32.totalorder %s18, 0
      %p66 = por %p64, %p65
      %s68 = sadd.s32 %s67, 1
      %p71 = scmp.eq.s32.totalorder %s12, 1
      %p72 = scmp.ne.s32.totalorder %s67, %s69
      %p73 = scmp.eq.s32.totalorder %s12, 0
      %p74 = por %p72, %p73
      %p75 = scmp.ne.s32.totalorder %s67, %s69
      %p76 = scmp.eq.s32.totalorder %s17, 1
      %p77 = por %p75, %p76
      %p78 = scmp.ne.s32.totalorder %s69, %s70
      %p79 = scmp.eq.s32.totalorder %s17, 0
      %p80 = por %p78, %p79
      %p81 = scmp.ne.s32.totalorder %s69, %s70
      %p82 = scmp.eq.s32.totalorder %s18, 1
      %p83 = por %p81, %p82
      %p85 = scmp.ne.s32.totalorder %s70, %s84
      %p86 = scmp.eq.s32.totalorder %s18, 0
      %p87 = por %p85, %p86
      %s88 = ssub.s32 %s12, %s19
      %p89 = scmp.eq.s32.totalorder %s88, 0
      %s91 = sadd.s32 %s90, 1
      %s92 = scalar_select %p89, %s90, %s91
      %p95 = pneg %p89
      %p96 = scmp.eq.s32.totalorder %s12, 1
      %p97 = por %p95, %p96
      %p98 = scmp.ne.s32.totalorder %s90, %s93
      %p99 = scmp.eq.s32.totalorder %s12, 0
      %p100 = por %p98, %p99
      %p101 = scmp.ne.s32.totalorder %s90, %s93
      %p102 = scmp.eq.s32.totalorder %s17, 1
      %p103 = por %p101, %p102
      %p104 = scmp.ne.s32.totalorder %s93, %s94
      %p105 = scmp.eq.s32.totalorder %s17, 0
      %p106 = por %p104, %p105
      %p107 = scmp.ne.s32.totalorder %s93, %s94
      %p108 = scmp.eq.s32.totalorder %s18, 1
      %p109 = por %p107, %p108
      %p111 = scmp.ne.s32.totalorder %s94, %s110
      %p112 = scmp.eq.s32.totalorder %s18, 0
      %p113 = por %p111, %p112
      %p114 = scmp.le.s32.totalorder 1, %s12
      %p115 = scmp.lt.s32.totalorder %s12, 3
      %p116 = pnand %p114, %p115
      %p117 = pneg %p116
      // Predicated region
      $region9: #{tpu_custom_call.1} parent=5 // pred_check
        _
      $region10: #{tpu_custom_call.1} parent=5 // pred_check_branch
        %119 = sbr.rel (%p116) target = $region12
      $region11: #{tpu_custom_call.1} parent=5 // pred_region
        %s120 = ssub.s32 %s12, 1
        // Predicated region
        $region13: #{tpu_custom_call.1} parent=11 // pred_check
          %p121 = pneg %p59
        $region14: #{tpu_custom_call.1} parent=11 // pred_check_branch
          %123 = sbr.rel (%p121) target = $region16
        $region15: #{tpu_custom_call.1} parent=11 // pred_region
          _
        $region16: #{tpu_custom_call.1} parent=11 // pred_fallthru
          _
        // Predicated region
        $region17: #{tpu_custom_call.1} parent=11 // pred_check
          %p124 = pneg %p80
        $region18: #{tpu_custom_call.1} parent=11 // pred_check_branch
          %126 = sbr.rel (%p124) target = $region20
        $region19: #{tpu_custom_call.1} parent=11 // pred_region
          _
        $region20: #{tpu_custom_call.1} parent=11 // pred_fallthru
          _
      $region12: #{tpu_custom_call.1} parent=5 // pred_fallthru
        _
      %p127 = scmp.lt.s32.totalorder %s12, 2
      // Predicated region
      $region21: #{tpu_custom_call.1} parent=5 // pred_check
        %p128 = pneg %p127
      $region22: #{tpu_custom_call.1} parent=5 // pred_check_branch
        %130 = sbr.rel (%p128) target = $region24
      $region23: #{tpu_custom_call.1} parent=5 // pred_region
        // Predicated region
        $region25: #{tpu_custom_call.1} parent=23 // pred_check
          %p131 = pneg %p32
        $region26: #{tpu_custom_call.1} parent=23 // pred_check_branch
          %133 = sbr.rel (%p131) target = $region28
        $region27: #{tpu_custom_call.1} parent=23 // pred_region
          %p134 = scmp.lt.s32.totalorder %s12, 1
          %s135 = scalar_select %p134, %s12, 1
          %s136 = smul.addr %s135, 3
          %s137 = smul.addr %s136, 4
          %s138 = scalar_lea.vmem %s0, %s137
        $region28: #{tpu_custom_call.1} parent=23 // pred_fallthru
          _
      $region24: #{tpu_custom_call.1} parent=5 // pred_fallthru
        _
      %p139 = scmp.le.s32.totalorder 1, %s12
      %p140 = scmp.lt.s32.totalorder %s12, 3
      %p141 = pnand %p139, %p140
      %p142 = pneg %p141
      // Predicated region
      $region29: #{tpu_custom_call.1} parent=5 // pred_check
        _
      $region30: #{tpu_custom_call.1} parent=5 // pred_check_branch
        %144 = sbr.rel (%p141) target = $region32
      $region31: #{tpu_custom_call.1} parent=5 // pred_region
        %s145 = ssub.s32 %s12, 1
        %p146 = scmp.lt.s32.totalorder %s17, 1
        %s147 = scalar_select %p146, %s17, 1
        %s148 = smul.addr %s147, 3
        %s149 = smul.addr %s148, 4
        %s150 = scalar_lea.vmem %s0, %s149
        %p151 = pneg %p38
        %p152 = pneg %p35
        %p153 = pneg %p59
        %p154 = pneg %p56
        %p155 = pneg %p80
        %p156 = pneg %p77
        %p157 = pneg %p106
        %p158 = pneg %p103
        %s159 = sand.u32 %s93, 1
        %s160 = scalar_lea.sflag [#allocation3], %s159
        %s161 = sand.u32 %s93, 1
        %s162 = smul.addr %s161, 16
        %s163 = scalar_lea.vmem [#allocation2], %s162
        %p164 = scmp.lt.s32.totalorder %s17, 1
        %s165 = scalar_select %p164, %s17, 1
        %s166 = smul.addr %s165, 3
        %s167 = smul.addr %s166, 4
        %s168 = scalar_lea.vmem %s0, %s167
        %v169 = vld [vmem:[%s2] sm:$0xff]
        %v170 = vld [vmem:[%s168] sm:$0xff]
        %v171 = vld [vmem:[%s1] sm:$0xff]
        %v173 = vcombine.high %v170, %v170
        %vm174 = vcmask 31744
        %v176 = vsel %vm174, %v171, 0
        %vm178 = vcmask 1043456
        %v179 = vsel %vm178, %v170, 0
        %v181 = vsel %vm178, %v173, 0
        %183 = vmatprep.subr.mxu0 0.0
        %184 = vmatpush1.msra.mxu0 0.0
        %185 = vmatprep.subr.mxu0 0.0
        %186 = vmatpush1.msra.mxu0 0.0
        %187 = vmatprep.subr.mxu0 0.0
        %188 = vmatpush1.msra.mxu0 0.0
        %189 = vmatprep.subr.mxu0 0.0
        %190 = vmatpush1.msra.mxu0 0.0
        %191 = vmatprep.subr.mxu0 0.0
        %192 = vmatpush1.msra.mxu0 0.0
        %193 = vmatprep.subr.mxu0 0.0
        %194 = vmatpush1.msra.mxu0 0.0
        %195 = vmatprep.subr.mxu0 0.0
        %196 = vmatpush1.msra.mxu0 0.0
        %197 = vmatprep.subr.mxu0 0.0
        %198 = vmatpush1.msra.mxu0 0.0
        %199 = vmatprep.subr.mxu0 0.0
        %200 = vmatpush1.msra.mxu0 0.0
        %201 = vmatprep.subr.mxu0 0.0
        %202 = vmatpush1.msra.mxu0 0.0
        %203 = vmatprep.subr.mxu0 0.0
        %204 = vmatpush1.msra.mxu0 0.0
        %205 = vmatprep.subr.mxu0 0.0
        %206 = vmatpush1.msra.mxu0 0.0
        %207 = vmatprep.subr.mxu0 0.0
        %208 = vmatpush1.msra.mxu0 0.0
        %209 = vmatprep.subr.mxu0 0.0
        %210 = vmatpush1.msra.mxu0 0.0
        %211 = vmatprep.subr.mxu0 0.0
        %212 = vmatpush1.msra.mxu0 0.0
        %213 = vmatprep.subr.mxu0 %v181
        %214 = vmatpush1.msra.mxu0 %v179
        %215 = vmatprep.subr.mxu0 0.0
        %216 = vmatpush2.msra.mxu0 0.0
        %217 = vmatprep.subr.mxu0 0.0
        %218 = vmatpush2.msra.mxu0 0.0
        %219 = vmatprep.subr.mxu0 0.0
        %220 = vmatpush2.msra.mxu0 0.0
        %221 = vmatprep.subr.mxu0 0.0
        %222 = vmatpush2.msra.mxu0 0.0
        %223 = vmatprep.subr.mxu0 0.0
        %224 = vmatpush2.msra.mxu0 0.0
        %225 = vmatprep.subr.mxu0 0.0
        %226 = vmatpush2.msra.mxu0 0.0
        %227 = vmatprep.subr.mxu0 0.0
        %228 = vmatpush2.msra.mxu0 0.0
        %229 = vmatprep.subr.mxu0 0.0
        %230 = vmatpush2.msra.mxu0 0.0
        %231 = vmatprep.subr.mxu0 0.0
        %232 = vmatpush2.msra.mxu0 0.0
        %233 = vmatprep.subr.mxu0 0.0
        %234 = vmatpush2.msra.mxu0 0.0
        %235 = vmatprep.subr.mxu0 0.0
        %236 = vmatpush2.msra.mxu0 0.0
        %237 = vmatprep.subr.mxu0 0.0
        %238 = vmatpush2.msra.mxu0 0.0
        %239 = vmatprep.subr.mxu0 0.0
        %240 = vmatpush2.msra.mxu0 0.0
        %241 = vmatprep.subr.mxu0 0.0
        %242 = vmatpush2.msra.mxu0 0.0
        %243 = vmatprep.subr.mxu0 0.0
        %244 = vmatpush2.msra.mxu0 0.0
        %245 = vmatprep.subr.mxu0 0.0
        %246 = vmatpush2.msra.mxu0 0.0
        %247 = vmatprep.mubr.f32.mxu0 0.0
        %248 = vmatmul.mubr.f32.gmra.mxu0 %v176
        %v249 = vpop.f32.mrf.mxu0
        %v250 = vadd.f32 0.0, %v249
        %v251 = vpop.f32.mrf.mxu0
        %v252 = vadd.f32 0.0, %v251
        %253 = vdwg.mxu0
        %255 = vset.pattern.permute.xlu0 0
        %256 = vperm.xlu0 %255, %v169
        %v257 = vpop.permute.xlu0 %256
        %v259 = vadd.f32 %v257, %v250
        %v260 = vadd.f32 %v257, %v252
        %v261 = vld [vmem:[%s168] sm:$0xff]
        %v262 = vld [vmem:[%s168 + $0x8] sm:$0xf]
        %s263 = scalar_lea.vmem %s1, 8
        %v264 = vld [vmem:[%s263] sm:$0xff]
        %v267 = vcombine.high %v261, %v261
        %268 = vrot.lane.b32.xlu0 %v261, 127
        %v269 = vpop.permute.xlu0 %268
        %270 = vrot.lane.b32.xlu0 %v267, 127
        %v271 = vpop.permute.xlu0 %270
        %272 = vrot.lane.b32.xlu0 %v262, 127
        %v273 = vpop.permute.xlu0 %272
        %vm274 = vcmask 1039360
        %v275 = vsel %vm274, %v269, %v271
        %v276 = vsel %vm274, %v271, %v273
        %v278 = vsel %vm174, %v264, 0
        %v280 = vsel %vm178, %v275, 0
        %v282 = vsel %vm178, %v276, 0
        %284 = vmatprep.subr.mxu0 0.0
        %285 = vmatpush1.msra.mxu0 0.0
        %286 = vmatprep.subr.mxu0 0.0
        %287 = vmatpush1.msra.mxu0 0.0
        %288 = vmatprep.subr.mxu0 0.0
        %289 = vmatpush1.msra.mxu0 0.0
        %290 = vmatprep.subr.mxu0 0.0
        %291 = vmatpush1.msra.mxu0 0.0
        %292 = vmatprep.subr.mxu0 0.0
        %293 = vmatpush1.msra.mxu0 0.0
        %294 = vmatprep.subr.mxu0 0.0
        %295 = vmatpush1.msra.mxu0 0.0
        %296 = vmatprep.subr.mxu0 0.0
        %297 = vmatpush1.msra.mxu0 0.0
        %298 = vmatprep.subr.mxu0 0.0
        %299 = vmatpush1.msra.mxu0 0.0
        %300 = vmatprep.subr.mxu0 0.0
        %301 = vmatpush1.msra.mxu0 0.0
        %302 = vmatprep.subr.mxu0 0.0
        %303 = vmatpush1.msra.mxu0 0.0
        %304 = vmatprep.subr.mxu0 0.0
        %305 = vmatpush1.msra.mxu0 0.0
        %306 = vmatprep.subr.mxu0 0.0
        %307 = vmatpush1.msra.mxu0 0.0
        %308 = vmatprep.subr.mxu0 0.0
        %309 = vmatpush1.msra.mxu0 0.0
        %310 = vmatprep.subr.mxu0 0.0
        %311 = vmatpush1.msra.mxu0 0.0
        %312 = vmatprep.subr.mxu0 0.0
        %313 = vmatpush1.msra.mxu0 0.0
        %314 = vmatprep.subr.mxu0 %v282
        %315 = vmatpush1.msra.mxu0 %v280
        %316 = vmatprep.subr.mxu0 0.0
        %317 = vmatpush2.msra.mxu0 0.0
        %318 = vmatprep.subr.mxu0 0.0
        %319 = vmatpush2.msra.mxu0 0.0
        %320 = vmatprep.subr.mxu0 0.0
        %321 = vmatpush2.msra.mxu0 0.0
        %322 = vmatprep.subr.mxu0 0.0
        %323 = vmatpush2.msra.mxu0 0.0
        %324 = vmatprep.subr.mxu0 0.0
        %325 = vmatpush2.msra.mxu0 0.0
        %326 = vmatprep.subr.mxu0 0.0
        %327 = vmatpush2.msra.mxu0 0.0
        %328 = vmatprep.subr.mxu0 0.0
        %329 = vmatpush2.msra.mxu0 0.0
        %330 = vmatprep.subr.mxu0 0.0
        %331 = vmatpush2.msra.mxu0 0.0
        %332 = vmatprep.subr.mxu0 0.0
        %333 = vmatpush2.msra.mxu0 0.0
        %334 = vmatprep.subr.mxu0 0.0
        %335 = vmatpush2.msra.mxu0 0.0
        %336 = vmatprep.subr.mxu0 0.0
        %337 = vmatpush2.msra.mxu0 0.0
        %338 = vmatprep.subr.mxu0 0.0
        %339 = vmatpush2.msra.mxu0 0.0
        %340 = vmatprep.subr.mxu0 0.0
        %341 = vmatpush2.msra.mxu0 0.0
        %342 = vmatprep.subr.mxu0 0.0
        %343 = vmatpush2.msra.mxu0 0.0
        %344 = vmatprep.subr.mxu0 0.0
        %345 = vmatpush2.msra.mxu0 0.0
        %346 = vmatprep.subr.mxu0 0.0
        %347 = vmatpush2.msra.mxu0 0.0
        %348 = vmatprep.mubr.f32.mxu0 0.0
        %349 = vmatmul.mubr.f32.gmra.mxu0 %v278
        %v350 = vpop.f32.mrf.mxu0
        %v351 = vadd.f32 0.0, %v350
        %v352 = vpop.f32.mrf.mxu0
        %v353 = vadd.f32 0.0, %v352
        %354 = vdwg.mxu0
        %v355 = vadd.f32 %v259, %v351
        %v356 = vadd.f32 %v260, %v353
        %v357 = vld [vmem:[%s168] sm:$0xff]
        %v358 = vld [vmem:[%s168 + $0x8] sm:$0xf]
        %s359 = scalar_lea.vmem %s1, 16
        %v360 = vld [vmem:[%s359] sm:$0xff]
        %v363 = vcombine.high %v357, %v357
        %364 = vrot.lane.b32.xlu0 %v357, 126
        %v365 = vpop.permute.xlu0 %364
        %366 = vrot.lane.b32.xlu0 %v363, 126
        %v367 = vpop.permute.xlu0 %366
        %368 = vrot.lane.b32.xlu0 %v358, 126
        %v369 = vpop.permute.xlu0 %368
        %vm370 = vcmask 1031168
        %v371 = vsel %vm370, %v365, %v367
        %v372 = vsel %vm370, %v367, %v369
        %v374 = vsel %vm174, %v360, 0
        %v376 = vsel %vm178, %v371, 0
        %v378 = vsel %vm178, %v372, 0
        %380 = vmatprep.subr.mxu0 0.0
        %381 = vmatpush1.msra.mxu0 0.0
        %382 = vmatprep.subr.mxu0 0.0
        %383 = vmatpush1.msra.mxu0 0.0
        %384 = vmatprep.subr.mxu0 0.0
        %385 = vmatpush1.msra.mxu0 0.0
        %386 = vmatprep.subr.mxu0 0.0
        %387 = vmatpush1.msra.mxu0 0.0
        %388 = vmatprep.subr.mxu0 0.0
        %389 = vmatpush1.msra.mxu0 0.0
        %390 = vmatprep.subr.mxu0 0.0
        %391 = vmatpush1.msra.mxu0 0.0
        %392 = vmatprep.subr.mxu0 0.0
        %393 = vmatpush1.msra.mxu0 0.0
        %394 = vmatprep.subr.mxu0 0.0
        %395 = vmatpush1.msra.mxu0 0.0
        %396 = vmatprep.subr.mxu0 0.0
        %397 = vmatpush1.msra.mxu0 0.0
        %398 = vmatprep.subr.mxu0 0.0
        %399 = vmatpush1.msra.mxu0 0.0
        %400 = vmatprep.subr.mxu0 0.0
        %401 = vmatpush1.msra.mxu0 0.0
        %402 = vmatprep.subr.mxu0 0.0
        %403 = vmatpush1.msra.mxu0 0.0
        %404 = vmatprep.subr.mxu0 0.0
        %405 = vmatpush1.msra.mxu0 0.0
        %406 = vmatprep.subr.mxu0 0.0
        %407 = vmatpush1.msra.mxu0 0.0
        %408 = vmatprep.subr.mxu0 0.0
        %409 = vmatpush1.msra.mxu0 0.0
        %410 = vmatprep.subr.mxu0 %v378
        %411 = vmatpush1.msra.mxu0 %v376
        %412 = vmatprep.subr.mxu0 0.0
        %413 = vmatpush2.msra.mxu0 0.0
        %414 = vmatprep.subr.mxu0 0.0
        %415 = vmatpush2.msra.mxu0 0.0
        %416 = vmatprep.subr.mxu0 0.0
        %417 = vmatpush2.msra.mxu0 0.0
        %418 = vmatprep.subr.mxu0 0.0
        %419 = vmatpush2.msra.mxu0 0.0
        %420 = vmatprep.subr.mxu0 0.0
        %421 = vmatpush2.msra.mxu0 0.0
        %422 = vmatprep.subr.mxu0 0.0
        %423 = vmatpush2.msra.mxu0 0.0
        %424 = vmatprep.subr.mxu0 0.0
        %425 = vmatpush2.msra.mxu0 0.0
        %426 = vmatprep.subr.mxu0 0.0
        %427 = vmatpush2.msra.mxu0 0.0
        %428 = vmatprep.subr.mxu0 0.0
        %429 = vmatpush2.msra.mxu0 0.0
        %430 = vmatprep.subr.mxu0 0.0
        %431 = vmatpush2.msra.mxu0 0.0
        %432 = vmatprep.subr.mxu0 0.0
        %433 = vmatpush2.msra.mxu0 0.0
        %434 = vmatprep.subr.mxu0 0.0
        %435 = vmatpush2.msra.mxu0 0.0
        %436 = vmatprep.subr.mxu0 0.0
        %437 = vmatpush2.msra.mxu0 0.0
        %438 = vmatprep.subr.mxu0 0.0
        %439 = vmatpush2.msra.mxu0 0.0
        %440 = vmatprep.subr.mxu0 0.0
        %441 = vmatpush2.msra.mxu0 0.0
        %442 = vmatprep.subr.mxu0 0.0
        %443 = vmatpush2.msra.mxu0 0.0
        %444 = vmatprep.mubr.f32.mxu0 0.0
        %445 = vmatmul.mubr.f32.gmra.mxu0 %v374
        %v446 = vpop.f32.mrf.mxu0
        %v447 = vadd.f32 0.0, %v446
        %v448 = vpop.f32.mrf.mxu0
        %v449 = vadd.f32 0.0, %v448
        %450 = vdwg.mxu0
        %v451 = vadd.f32 %v355, %v447
        %v452 = vadd.f32 %v356, %v449
        %v453 = vld [vmem:[%s168] sm:$0xff]
        %v454 = vld [vmem:[%s168 + $0x8] sm:$0xf]
        %s455 = scalar_lea.vmem %s1, 24
        %v456 = vld [vmem:[%s455] sm:$0xff]
        %v459 = vcombine.high %v453, %v453
        %460 = vrot.lane.b32.xlu0 %v453, 112
        %v461 = vpop.permute.xlu0 %460
        %462 = vrot.lane.b32.xlu0 %v459, 112
        %v463 = vpop.permute.xlu0 %462
        %464 = vrot.lane.b32.xlu0 %v454, 112
        %v465 = vpop.permute.xlu0 %464
        %vm466 = vcmask 916480
        %v467 = vsel %vm466, %v461, %v463
        %v468 = vsel %vm466, %v463, %v465
        %v470 = vsel %vm174, %v456, 0
        %v472 = vsel %vm178, %v467, 0
        %v474 = vsel %vm178, %v468, 0
        %476 = vmatprep.subr.mxu0 0.0
        %477 = vmatpush1.msra.mxu0 0.0
        %478 = vmatprep.subr.mxu0 0.0
        %479 = vmatpush1.msra.mxu0 0.0
        %480 = vmatprep.subr.mxu0 0.0
        %481 = vmatpush1.msra.mxu0 0.0
        %482 = vmatprep.subr.mxu0 0.0
        %483 = vmatpush1.msra.mxu0 0.0
        %484 = vmatprep.subr.mxu0 0.0
        %485 = vmatpush1.msra.mxu0 0.0
        %486 = vmatprep.subr.mxu0 0.0
        %487 = vmatpush1.msra.mxu0 0.0
        %488 = vmatprep.subr.mxu0 0.0
        %489 = vmatpush1.msra.mxu0 0.0
        %490 = vmatprep.subr.mxu0 0.0
        %491 = vmatpush1.msra.mxu0 0.0
        %492 = vmatprep.subr.mxu0 0.0
        %493 = vmatpush1.msra.mxu0 0.0
        %494 = vmatprep.subr.mxu0 0.0
        %495 = vmatpush1.msra.mxu0 0.0
        %496 = vmatprep.subr.mxu0 0.0
        %497 = vmatpush1.msra.mxu0 0.0
        %498 = vmatprep.subr.mxu0 0.0
        %499 = vmatpush1.msra.mxu0 0.0
        %500 = vmatprep.subr.mxu0 0.0
        %501 = vmatpush1.msra.mxu0 0.0
        %502 = vmatprep.subr.mxu0 0.0
        %503 = vmatpush1.msra.mxu0 0.0
        %504 = vmatprep.subr.mxu0 0.0
        %505 = vmatpush1.msra.mxu0 0.0
        %506 = vmatprep.subr.mxu0 %v474
        %507 = vmatpush1.msra.mxu0 %v472
        %508 = vmatprep.subr.mxu0 0.0
        %509 = vmatpush2.msra.mxu0 0.0
        %510 = vmatprep.subr.mxu0 0.0
        %511 = vmatpush2.msra.mxu0 0.0
        %512 = vmatprep.subr.mxu0 0.0
        %513 = vmatpush2.msra.mxu0 0.0
        %514 = vmatprep.subr.mxu0 0.0
        %515 = vmatpush2.msra.mxu0 0.0
        %516 = vmatprep.subr.mxu0 0.0
        %517 = vmatpush2.msra.mxu0 0.0
        %518 = vmatprep.subr.mxu0 0.0
        %519 = vmatpush2.msra.mxu0 0.0
        %520 = vmatprep.subr.mxu0 0.0
        %521 = vmatpush2.msra.mxu0 0.0
        %522 = vmatprep.subr.mxu0 0.0
        %523 = vmatpush2.msra.mxu0 0.0
        %524 = vmatprep.subr.mxu0 0.0
        %525 = vmatpush2.msra.mxu0 0.0
        %526 = vmatprep.subr.mxu0 0.0
        %527 = vmatpush2.msra.mxu0 0.0
        %528 = vmatprep.subr.mxu0 0.0
        %529 = vmatpush2.msra.mxu0 0.0
        %530 = vmatprep.subr.mxu0 0.0
        %531 = vmatpush2.msra.mxu0 0.0
        %532 = vmatprep.subr.mxu0 0.0
        %533 = vmatpush2.msra.mxu0 0.0
        %534 = vmatprep.subr.mxu0 0.0
        %535 = vmatpush2.msra.mxu0 0.0
        %536 = vmatprep.subr.mxu0 0.0
        %537 = vmatpush2.msra.mxu0 0.0
        %538 = vmatprep.subr.mxu0 0.0
        %539 = vmatpush2.msra.mxu0 0.0
        %540 = vmatprep.mubr.f32.mxu0 0.0
        %541 = vmatmul.mubr.f32.gmra.mxu0 %v470
        %v542 = vpop.f32.mrf.mxu0
        %v543 = vadd.f32 0.0, %v542
        %v544 = vpop.f32.mrf.mxu0
        %v545 = vadd.f32 0.0, %v544
        %546 = vdwg.mxu0
        %v547 = vadd.f32 %v451, %v543
        %v548 = vadd.f32 %v452, %v545
        %v549 = vld [vmem:[%s168] sm:$0xff]
        %v550 = vld [vmem:[%s168 + $0x8] sm:$0xf]
        %s551 = scalar_lea.vmem %s1, 32
        %v552 = vld [vmem:[%s551] sm:$0xff]
        %v555 = vcombine.high %v549, %v549
        %556 = vrot.lane.b32.xlu0 %v549, 111
        %v557 = vpop.permute.xlu0 %556
        %558 = vrot.lane.b32.xlu0 %v555, 111
        %v559 = vpop.permute.xlu0 %558
        %560 = vrot.lane.b32.xlu0 %v550, 111
        %v561 = vpop.permute.xlu0 %560
        %vm562 = vcmask 908288
        %v563 = vsel %vm562, %v557, %v559
        %v564 = vsel %vm562, %v559, %v561
        %v566 = vsel %vm174, %v552, 0
        %v568 = vsel %vm178, %v563, 0
        %v570 = vsel %vm178, %v564, 0
        %572 = vmatprep.subr.mxu0 0.0
        %573 = vmatpush1.msra.mxu0 0.0
        %574 = vmatprep.subr.mxu0 0.0
        %575 = vmatpush1.msra.mxu0 0.0
        %576 = vmatprep.subr.mxu0 0.0
        %577 = vmatpush1.msra.mxu0 0.0
        %578 = vmatprep.subr.mxu0 0.0
        %579 = vmatpush1.msra.mxu0 0.0
        %580 = vmatprep.subr.mxu0 0.0
        %581 = vmatpush1.msra.mxu0 0.0
        %582 = vmatprep.subr.mxu0 0.0
        %583 = vmatpush1.msra.mxu0 0.0
        %584 = vmatprep.subr.mxu0 0.0
        %585 = vmatpush1.msra.mxu0 0.0
        %586 = vmatprep.subr.mxu0 0.0
        %587 = vmatpush1.msra.mxu0 0.0
        %588 = vmatprep.subr.mxu0 0.0
        %589 = vmatpush1.msra.mxu0 0.0
        %590 = vmatprep.subr.mxu0 0.0
        %591 = vmatpush1.msra.mxu0 0.0
        %592 = vmatprep.subr.mxu0 0.0
        %593 = vmatpush1.msra.mxu0 0.0
        %594 = vmatprep.subr.mxu0 0.0
        %595 = vmatpush1.msra.mxu0 0.0
        %596 = vmatprep.subr.mxu0 0.0
        %597 = vmatpush1.msra.mxu0 0.0
        %598 = vmatprep.subr.mxu0 0.0
        %599 = vmatpush1.msra.mxu0 0.0
        %600 = vmatprep.subr.mxu0 0.0
        %601 = vmatpush1.msra.mxu0 0.0
        %602 = vmatprep.subr.mxu0 %v570
        %603 = vmatpush1.msra.mxu0 %v568
        %604 = vmatprep.subr.mxu0 0.0
        %605 = vmatpush2.msra.mxu0 0.0
        %606 = vmatprep.subr.mxu0 0.0
        %607 = vmatpush2.msra.mxu0 0.0
        %608 = vmatprep.subr.mxu0 0.0
        %609 = vmatpush2.msra.mxu0 0.0
        %610 = vmatprep.subr.mxu0 0.0
        %611 = vmatpush2.msra.mxu0 0.0
        %612 = vmatprep.subr.mxu0 0.0
        %613 = vmatpush2.msra.mxu0 0.0
        %614 = vmatprep.subr.mxu0 0.0
        %615 = vmatpush2.msra.mxu0 0.0
        %616 = vmatprep.subr.mxu0 0.0
        %617 = vmatpush2.msra.mxu0 0.0
        %618 = vmatprep.subr.mxu0 0.0
        %619 = vmatpush2.msra.mxu0 0.0
        %620 = vmatprep.subr.mxu0 0.0
        %621 = vmatpush2.msra.mxu0 0.0
        %622 = vmatprep.subr.mxu0 0.0
        %623 = vmatpush2.msra.mxu0 0.0
        %624 = vmatprep.subr.mxu0 0.0
        %625 = vmatpush2.msra.mxu0 0.0
        %626 = vmatprep.subr.mxu0 0.0
        %627 = vmatpush2.msra.mxu0 0.0
        %628 = vmatprep.subr.mxu0 0.0
        %629 = vmatpush2.msra.mxu0 0.0
        %630 = vmatprep.subr.mxu0 0.0
        %631 = vmatpush2.msra.mxu0 0.0
        %632 = vmatprep.subr.mxu0 0.0
        %633 = vmatpush2.msra.mxu0 0.0
        %634 = vmatprep.subr.mxu0 0.0
        %635 = vmatpush2.msra.mxu0 0.0
        %636 = vmatprep.mubr.f32.mxu0 0.0
        %637 = vmatmul.mubr.f32.gmra.mxu0 %v566
        %v638 = vpop.f32.mrf.mxu0
        %v639 = vadd.f32 0.0, %v638
        %v640 = vpop.f32.mrf.mxu0
        %v641 = vadd.f32 0.0, %v640
        %642 = vdwg.mxu0
        %v643 = vadd.f32 %v547, %v639
        %v644 = vadd.f32 %v548, %v641
        %v645 = vld [vmem:[%s168] sm:$0xff]
        %v646 = vld [vmem:[%s168 + $0x8] sm:$0xf]
        %s647 = scalar_lea.vmem %s1, 40
        %v648 = vld [vmem:[%s647] sm:$0xff]
        %v651 = vcombine.high %v645, %v645
        %652 = vrot.lane.b32.xlu0 %v645, 110
        %v653 = vpop.permute.xlu0 %652
        %654 = vrot.lane.b32.xlu0 %v651, 110
        %v655 = vpop.permute.xlu0 %654
        %656 = vrot.lane.b32.xlu0 %v646, 110
        %v657 = vpop.permute.xlu0 %656
        %vm658 = vcmask 900096
        %v659 = vsel %vm658, %v653, %v655
        %v660 = vsel %vm658, %v655, %v657
        %v662 = vsel %vm174, %v648, 0
        %v664 = vsel %vm178, %v659, 0
        %v666 = vsel %vm178, %v660, 0
        %668 = vmatprep.subr.mxu0 0.0
        %669 = vmatpush1.msra.mxu0 0.0
        %670 = vmatprep.subr.mxu0 0.0
        %671 = vmatpush1.msra.mxu0 0.0
        %672 = vmatprep.subr.mxu0 0.0
        %673 = vmatpush1.msra.mxu0 0.0
        %674 = vmatprep.subr.mxu0 0.0
        %675 = vmatpush1.msra.mxu0 0.0
        %676 = vmatprep.subr.mxu0 0.0
        %677 = vmatpush1.msra.mxu0 0.0
        %678 = vmatprep.subr.mxu0 0.0
        %679 = vmatpush1.msra.mxu0 0.0
        %680 = vmatprep.subr.mxu0 0.0
        %681 = vmatpush1.msra.mxu0 0.0
        %682 = vmatprep.subr.mxu0 0.0
        %683 = vmatpush1.msra.mxu0 0.0
        %684 = vmatprep.subr.mxu0 0.0
        %685 = vmatpush1.msra.mxu0 0.0
        %686 = vmatprep.subr.mxu0 0.0
        %687 = vmatpush1.msra.mxu0 0.0
        %688 = vmatprep.subr.mxu0 0.0
        %689 = vmatpush1.msra.mxu0 0.0
        %690 = vmatprep.subr.mxu0 0.0
        %691 = vmatpush1.msra.mxu0 0.0
        %692 = vmatprep.subr.mxu0 0.0
        %693 = vmatpush1.msra.mxu0 0.0
        %694 = vmatprep.subr.mxu0 0.0
        %695 = vmatpush1.msra.mxu0 0.0
        %696 = vmatprep.subr.mxu0 0.0
        %697 = vmatpush1.msra.mxu0 0.0
        %698 = vmatprep.subr.mxu0 %v666
        %699 = vmatpush1.msra.mxu0 %v664
        %700 = vmatprep.subr.mxu0 0.0
        %701 = vmatpush2.msra.mxu0 0.0
        %702 = vmatprep.subr.mxu0 0.0
        %703 = vmatpush2.msra.mxu0 0.0
        %704 = vmatprep.subr.mxu0 0.0
        %705 = vmatpush2.msra.mxu0 0.0
        %706 = vmatprep.subr.mxu0 0.0
        %707 = vmatpush2.msra.mxu0 0.0
        %708 = vmatprep.subr.mxu0 0.0
        %709 = vmatpush2.msra.mxu0 0.0
        %710 = vmatprep.subr.mxu0 0.0
        %711 = vmatpush2.msra.mxu0 0.0
        %712 = vmatprep.subr.mxu0 0.0
        %713 = vmatpush2.msra.mxu0 0.0
        %714 = vmatprep.subr.mxu0 0.0
        %715 = vmatpush2.msra.mxu0 0.0
        %716 = vmatprep.subr.mxu0 0.0
        %717 = vmatpush2.msra.mxu0 0.0
        %718 = vmatprep.subr.mxu0 0.0
        %719 = vmatpush2.msra.mxu0 0.0
        %720 = vmatprep.subr.mxu0 0.0
        %721 = vmatpush2.msra.mxu0 0.0
        %722 = vmatprep.subr.mxu0 0.0
        %723 = vmatpush2.msra.mxu0 0.0
        %724 = vmatprep.subr.mxu0 0.0
        %725 = vmatpush2.msra.mxu0 0.0
        %726 = vmatprep.subr.mxu0 0.0
        %727 = vmatpush2.msra.mxu0 0.0
        %728 = vmatprep.subr.mxu0 0.0
        %729 = vmatpush2.msra.mxu0 0.0
        %730 = vmatprep.subr.mxu0 0.0
        %731 = vmatpush2.msra.mxu0 0.0
        %732 = vmatprep.mubr.f32.mxu0 0.0
        %733 = vmatmul.mubr.f32.gmra.mxu0 %v662
        %v734 = vpop.f32.mrf.mxu0
        %v735 = vadd.f32 0.0, %v734
        %v736 = vpop.f32.mrf.mxu0
        %v737 = vadd.f32 0.0, %v736
        %738 = vdwg.mxu0
        %v739 = vadd.f32 %v643, %v735
        %v740 = vadd.f32 %v644, %v737
        %v741 = vld [vmem:[%s168] sm:$0xff]
        %v742 = vld [vmem:[%s168 + $0x8] sm:$0xf]
        %s743 = scalar_lea.vmem %s1, 48
        %v744 = vld [vmem:[%s743] sm:$0xff]
        %v747 = vcombine.high %v741, %v741
        %748 = vrot.lane.b32.xlu0 %v741, 96
        %v749 = vpop.permute.xlu0 %748
        %750 = vrot.lane.b32.xlu0 %v747, 96
        %v751 = vpop.permute.xlu0 %750
        %752 = vrot.lane.b32.xlu0 %v742, 96
        %v753 = vpop.permute.xlu0 %752
        %vm754 = vcmask 785408
        %v755 = vsel %vm754, %v749, %v751
        %v756 = vsel %vm754, %v751, %v753
        %v758 = vsel %vm174, %v744, 0
        %v760 = vsel %vm178, %v755, 0
        %v762 = vsel %vm178, %v756, 0
        %764 = vmatprep.subr.mxu0 0.0
        %765 = vmatpush1.msra.mxu0 0.0
        %766 = vmatprep.subr.mxu0 0.0
        %767 = vmatpush1.msra.mxu0 0.0
        %768 = vmatprep.subr.mxu0 0.0
        %769 = vmatpush1.msra.mxu0 0.0
        %770 = vmatprep.subr.mxu0 0.0
        %771 = vmatpush1.msra.mxu0 0.0
        %772 = vmatprep.subr.mxu0 0.0
        %773 = vmatpush1.msra.mxu0 0.0
        %774 = vmatprep.subr.mxu0 0.0
        %775 = vmatpush1.msra.mxu0 0.0
        %776 = vmatprep.subr.mxu0 0.0
        %777 = vmatpush1.msra.mxu0 0.0
        %778 = vmatprep.subr.mxu0 0.0
        %779 = vmatpush1.msra.mxu0 0.0
        %780 = vmatprep.subr.mxu0 0.0
        %781 = vmatpush1.msra.mxu0 0.0
        %782 = vmatprep.subr.mxu0 0.0
        %783 = vmatpush1.msra.mxu0 0.0
        %784 = vmatprep.subr.mxu0 0.0
        %785 = vmatpush1.msra.mxu0 0.0
        %786 = vmatprep.subr.mxu0 0.0
        %787 = vmatpush1.msra.mxu0 0.0
        %788 = vmatprep.subr.mxu0 0.0
        %789 = vmatpush1.msra.mxu0 0.0
        %790 = vmatprep.subr.mxu0 0.0
        %791 = vmatpush1.msra.mxu0 0.0
        %792 = vmatprep.subr.mxu0 0.0
        %793 = vmatpush1.msra.mxu0 0.0
        %794 = vmatprep.subr.mxu0 %v762
        %795 = vmatpush1.msra.mxu0 %v760
        %796 = vmatprep.subr.mxu0 0.0
        %797 = vmatpush2.msra.mxu0 0.0
        %798 = vmatprep.subr.mxu0 0.0
        %799 = vmatpush2.msra.mxu0 0.0
        %800 = vmatprep.subr.mxu0 0.0
        %801 = vmatpush2.msra.mxu0 0.0
        %802 = vmatprep.subr.mxu0 0.0
        %803 = vmatpush2.msra.mxu0 0.0
        %804 = vmatprep.subr.mxu0 0.0
        %805 = vmatpush2.msra.mxu0 0.0
        %806 = vmatprep.subr.mxu0 0.0
        %807 = vmatpush2.msra.mxu0 0.0
        %808 = vmatprep.subr.mxu0 0.0
        %809 = vmatpush2.msra.mxu0 0.0
        %810 = vmatprep.subr.mxu0 0.0
        %811 = vmatpush2.msra.mxu0 0.0
        %812 = vmatprep.subr.mxu0 0.0
        %813 = vmatpush2.msra.mxu0 0.0
        %814 = vmatprep.subr.mxu0 0.0
        %815 = vmatpush2.msra.mxu0 0.0
        %816 = vmatprep.subr.mxu0 0.0
        %817 = vmatpush2.msra.mxu0 0.0
        %818 = vmatprep.subr.mxu0 0.0
        %819 = vmatpush2.msra.mxu0 0.0
        %820 = vmatprep.subr.mxu0 0.0
        %821 = vmatpush2.msra.mxu0 0.0
        %822 = vmatprep.subr.mxu0 0.0
        %823 = vmatpush2.msra.mxu0 0.0
        %824 = vmatprep.subr.mxu0 0.0
        %825 = vmatpush2.msra.mxu0 0.0
        %826 = vmatprep.subr.mxu0 0.0
        %827 = vmatpush2.msra.mxu0 0.0
        %828 = vmatprep.mubr.f32.mxu0 0.0
        %829 = vmatmul.mubr.f32.gmra.mxu0 %v758
        %v830 = vpop.f32.mrf.mxu0
        %v831 = vadd.f32 0.0, %v830
        %v832 = vpop.f32.mrf.mxu0
        %v833 = vadd.f32 0.0, %v832
        %834 = vdwg.mxu0
        %v835 = vadd.f32 %v739, %v831
        %v836 = vadd.f32 %v740, %v833
        %v837 = vld [vmem:[%s168] sm:$0xff]
        %v838 = vld [vmem:[%s168 + $0x8] sm:$0xf]
        %s839 = scalar_lea.vmem %s1, 56
        %v840 = vld [vmem:[%s839] sm:$0xff]
        %v843 = vcombine.high %v837, %v837
        %844 = vrot.lane.b32.xlu0 %v837, 95
        %v845 = vpop.permute.xlu0 %844
        %846 = vrot.lane.b32.xlu0 %v843, 95
        %v847 = vpop.permute.xlu0 %846
        %848 = vrot.lane.b32.xlu0 %v838, 95
        %v849 = vpop.permute.xlu0 %848
        %vm850 = vcmask 777216
        %v851 = vsel %vm850, %v845, %v847
        %v852 = vsel %vm850, %v847, %v849
        %v854 = vsel %vm174, %v840, 0
        %v856 = vsel %vm178, %v851, 0
        %v858 = vsel %vm178, %v852, 0
        %860 = vmatprep.subr.mxu0 0.0
        %861 = vmatpush1.msra.mxu0 0.0
        %862 = vmatprep.subr.mxu0 0.0
        %863 = vmatpush1.msra.mxu0 0.0
        %864 = vmatprep.subr.mxu0 0.0
        %865 = vmatpush1.msra.mxu0 0.0
        %866 = vmatprep.subr.mxu0 0.0
        %867 = vmatpush1.msra.mxu0 0.0
        %868 = vmatprep.subr.mxu0 0.0
        %869 = vmatpush1.msra.mxu0 0.0
        %870 = vmatprep.subr.mxu0 0.0
        %871 = vmatpush1.msra.mxu0 0.0
        %872 = vmatprep.subr.mxu0 0.0
        %873 = vmatpush1.msra.mxu0 0.0
        %874 = vmatprep.subr.mxu0 0.0
        %875 = vmatpush1.msra.mxu0 0.0
        %876 = vmatprep.subr.mxu0 0.0
        %877 = vmatpush1.msra.mxu0 0.0
        %878 = vmatprep.subr.mxu0 0.0
        %879 = vmatpush1.msra.mxu0 0.0
        %880 = vmatprep.subr.mxu0 0.0
        %881 = vmatpush1.msra.mxu0 0.0
        %882 = vmatprep.subr.mxu0 0.0
        %883 = vmatpush1.msra.mxu0 0.0
        %884 = vmatprep.subr.mxu0 0.0
        %885 = vmatpush1.msra.mxu0 0.0
        %886 = vmatprep.subr.mxu0 0.0
        %887 = vmatpush1.msra.mxu0 0.0
        %888 = vmatprep.subr.mxu0 0.0
        %889 = vmatpush1.msra.mxu0 0.0
        %890 = vmatprep.subr.mxu0 %v858
        %891 = vmatpush1.msra.mxu0 %v856
        %892 = vmatprep.subr.mxu0 0.0
        %893 = vmatpush2.msra.mxu0 0.0
        %894 = vmatprep.subr.mxu0 0.0
        %895 = vmatpush2.msra.mxu0 0.0
        %896 = vmatprep.subr.mxu0 0.0
        %897 = vmatpush2.msra.mxu0 0.0
        %898 = vmatprep.subr.mxu0 0.0
        %899 = vmatpush2.msra.mxu0 0.0
        %900 = vmatprep.subr.mxu0 0.0
        %901 = vmatpush2.msra.mxu0 0.0
        %902 = vmatprep.subr.mxu0 0.0
        %903 = vmatpush2.msra.mxu0 0.0
        %904 = vmatprep.subr.mxu0 0.0
        %905 = vmatpush2.msra.mxu0 0.0
        %906 = vmatprep.subr.mxu0 0.0
        %907 = vmatpush2.msra.mxu0 0.0
        %908 = vmatprep.subr.mxu0 0.0
        %909 = vmatpush2.msra.mxu0 0.0
        %910 = vmatprep.subr.mxu0 0.0
        %911 = vmatpush2.msra.mxu0 0.0
        %912 = vmatprep.subr.mxu0 0.0
        %913 = vmatpush2.msra.mxu0 0.0
        %914 = vmatprep.subr.mxu0 0.0
        %915 = vmatpush2.msra.mxu0 0.0
        %916 = vmatprep.subr.mxu0 0.0
        %917 = vmatpush2.msra.mxu0 0.0
        %918 = vmatprep.subr.mxu0 0.0
        %919 = vmatpush2.msra.mxu0 0.0
        %920 = vmatprep.subr.mxu0 0.0
        %921 = vmatpush2.msra.mxu0 0.0
        %922 = vmatprep.subr.mxu0 0.0
        %923 = vmatpush2.msra.mxu0 0.0
        %924 = vmatprep.mubr.f32.mxu0 0.0
        %925 = vmatmul.mubr.f32.gmra.mxu0 %v854
        %v926 = vpop.f32.mrf.mxu0
        %v927 = vadd.f32 0.0, %v926
        %v928 = vpop.f32.mrf.mxu0
        %v929 = vadd.f32 0.0, %v928
        %930 = vdwg.mxu0
        %v931 = vadd.f32 %v835, %v927
        %v932 = vadd.f32 %v836, %v929
        %v933 = vld [vmem:[%s168] sm:$0xff]
        %v934 = vld [vmem:[%s168 + $0x8] sm:$0xf]
        %s935 = scalar_lea.vmem %s1, 64
        %v936 = vld [vmem:[%s935] sm:$0xff]
        %v939 = vcombine.high %v933, %v933
        %940 = vrot.lane.b32.xlu0 %v933, 94
        %v941 = vpop.permute.xlu0 %940
        %942 = vrot.lane.b32.xlu0 %v939, 94
        %v943 = vpop.permute.xlu0 %942
        %944 = vrot.lane.b32.xlu0 %v934, 94
        %v945 = vpop.permute.xlu0 %944
        %vm946 = vcmask 769024
        %v947 = vsel %vm946, %v941, %v943
        %v948 = vsel %vm946, %v943, %v945
        %v950 = vsel %vm174, %v936, 0
        %v952 = vsel %vm178, %v947, 0
        %v954 = vsel %vm178, %v948, 0
        %956 = vmatprep.subr.mxu0 0.0
        %957 = vmatpush1.msra.mxu0 0.0
        %958 = vmatprep.subr.mxu0 0.0
        %959 = vmatpush1.msra.mxu0 0.0
        %960 = vmatprep.subr.mxu0 0.0
        %961 = vmatpush1.msra.mxu0 0.0
        %962 = vmatprep.subr.mxu0 0.0
        %963 = vmatpush1.msra.mxu0 0.0
        %964 = vmatprep.subr.mxu0 0.0
        %965 = vmatpush1.msra.mxu0 0.0
        %966 = vmatprep.subr.mxu0 0.0
        %967 = vmatpush1.msra.mxu0 0.0
        %968 = vmatprep.subr.mxu0 0.0
        %969 = vmatpush1.msra.mxu0 0.0
        %970 = vmatprep.subr.mxu0 0.0
        %971 = vmatpush1.msra.mxu0 0.0
        %972 = vmatprep.subr.mxu0 0.0
        %973 = vmatpush1.msra.mxu0 0.0
        %974 = vmatprep.subr.mxu0 0.0
        %975 = vmatpush1.msra.mxu0 0.0
        %976 = vmatprep.subr.mxu0 0.0
        %977 = vmatpush1.msra.mxu0 0.0
        %978 = vmatprep.subr.mxu0 0.0
        %979 = vmatpush1.msra.mxu0 0.0
        %980 = vmatprep.subr.mxu0 0.0
        %981 = vmatpush1.msra.mxu0 0.0
        %982 = vmatprep.subr.mxu0 0.0
        %983 = vmatpush1.msra.mxu0 0.0
        %984 = vmatprep.subr.mxu0 0.0
        %985 = vmatpush1.msra.mxu0 0.0
        %986 = vmatprep.subr.mxu0 %v954
        %987 = vmatpush1.msra.mxu0 %v952
        %988 = vmatprep.subr.mxu0 0.0
        %989 = vmatpush2.msra.mxu0 0.0
        %990 = vmatprep.subr.mxu0 0.0
        %991 = vmatpush2.msra.mxu0 0.0
        %992 = vmatprep.subr.mxu0 0.0
        %993 = vmatpush2.msra.mxu0 0.0
        %994 = vmatprep.subr.mxu0 0.0
        %995 = vmatpush2.msra.mxu0 0.0
        %996 = vmatprep.subr.mxu0 0.0
        %997 = vmatpush2.msra.mxu0 0.0
        %998 = vmatprep.subr.mxu0 0.0
        %999 = vmatpush2.msra.mxu0 0.0
        %1000 = vmatprep.subr.mxu0 0.0
        %1001 = vmatpush2.msra.mxu0 0.0
        %1002 = vmatprep.subr.mxu0 0.0
        %1003 = vmatpush2.msra.mxu0 0.0
        %1004 = vmatprep.subr.mxu0 0.0
        %1005 = vmatpush2.msra.mxu0 0.0
        %1006 = vmatprep.subr.mxu0 0.0
        %1007 = vmatpush2.msra.mxu0 0.0
        %1008 = vmatprep.subr.mxu0 0.0
        %1009 = vmatpush2.msra.mxu0 0.0
        %1010 = vmatprep.subr.mxu0 0.0
        %1011 = vmatpush2.msra.mxu0 0.0
        %1012 = vmatprep.subr.mxu0 0.0
        %1013 = vmatpush2.msra.mxu0 0.0
        %1014 = vmatprep.subr.mxu0 0.0
        %1015 = vmatpush2.msra.mxu0 0.0
        %1016 = vmatprep.subr.mxu0 0.0
        %1017 = vmatpush2.msra.mxu0 0.0
        %1018 = vmatprep.subr.mxu0 0.0
        %1019 = vmatpush2.msra.mxu0 0.0
        %1020 = vmatprep.mubr.f32.mxu0 0.0
        %1021 = vmatmul.mubr.f32.gmra.mxu0 %v950
        %v1022 = vpop.f32.mrf.mxu0
        %v1023 = vadd.f32 0.0, %v1022
        %v1024 = vpop.f32.mrf.mxu0
        %v1025 = vadd.f32 0.0, %v1024
        %1026 = vdwg.mxu0
        %v1027 = vadd.f32 %v931, %v1023
        %v1028 = vadd.f32 %v932, %v1025
        %1029 = vst [vmem:[%s163] sm:$0xff] %v1027
        %1030 = vst [vmem:[%s163 + $0x8] sm:$0xff] %v1028
        %s1031 = sand.u32 %s93, 1
        %s1032 = scalar_lea.sflag [#allocation3], %s1031
        %s1033 = sand.u32 %s93, 1
        %s1034 = smul.addr %s1033, 16
        %s1035 = scalar_lea.vmem [#allocation2], %s1034
        // Predicated region
        $region33: #{tpu_custom_call.1} parent=31 // pred_check
          %p1036 = pneg %p103
        $region34: #{tpu_custom_call.1} parent=31 // pred_check_branch
          %1038 = sbr.rel (%p1036) target = $region36
        $region35: #{tpu_custom_call.1} parent=31 // pred_region
          %s1040 = ssub.s32 256, 256
          %1041 = vsyncadd %s1032, %s1040
          %s1042 = smul.addr %s17, 2
          %s1043 = smul.addr %s1042, 128
          %s1044 = scalar_lea.hbm %s3, %s1043
          %s1046 = sshll.u32 %s1035, 4
          %s1047 = int_to_ptr.vmem [resolvable:$true] %s1046
          %1049 = dma.vmem_to_hbm [thread:$0]  %s1047, 256, %s1044, %s1032
        $region36: #{tpu_custom_call.1} parent=31 // pred_fallthru
          _
      $region32: #{tpu_custom_call.1} parent=5 // pred_fallthru
        _
      %p1050 = scmp.le.s32.totalorder 2, %s12
      // Predicated region
      $region37: #{tpu_custom_call.1} parent=5 // pred_check
        %p1051 = pneg %p1050
      $region38: #{tpu_custom_call.1} parent=5 // pred_check_branch
        %1053 = sbr.rel (%p1051) target = $region40
      $region39: #{tpu_custom_call.1} parent=5 // pred_region
        %s1054 = ssub.s32 %s12, 2
        // Predicated region
        $region41: #{tpu_custom_call.1} parent=39 // pred_check
          %p1055 = pneg %p109
        $region42: #{tpu_custom_call.1} parent=39 // pred_check_branch
          %1057 = sbr.rel (%p1055) target = $region44
        $region43: #{tpu_custom_call.1} parent=39 // pred_region
          %s1058 = sand.u32 %s94, 1
          %s1059 = scalar_lea.sflag [#allocation3], %s1058
          %s1060 = sand.u32 %s94, 1
          %s1061 = smul.addr %s1060, 16
          %s1062 = scalar_lea.vmem [#allocation2], %s1061
          %1063 = dma.done %s1059, 256
        $region44: #{tpu_custom_call.1} parent=39 // pred_fallthru
          _
      $region40: #{tpu_custom_call.1} parent=5 // pred_fallthru
        _
    $region6: #{tpu_custom_call.1} parent=1 // loop_footer
      %s16 = sadd.s32 1, %s12
    $region7: #{tpu_custom_call.1} parent=1 // loop_footer_branch
      %11 = sbr.rel target = $region3
    $region8: #{tpu_custom_call.1} parent=1 // loop_exit
      _
    %1064 = vsyncpa [#allocation3], 1
    %s1065 = scalar_lea.sflag [#allocation3], 1
    %1066 = vsyncpa %s1065, 1

</llo_original>
